<compile_context>
chip_gen: v5e
topology: v5e:2x2
jax: 0.10.0
libtpu: 0.0.40
codegen_flags: <defaults>
</compile_context>

<pallas_src>
import functools
import math

import jax
import jax.numpy as jnp
from jax import lax
from jax.experimental import pallas as pl
from jax.experimental.pallas import tpu as pltpu

NUM_CLASSES = 26


# --------------------------------------------------------------------------
# Fused matmul kernel:  out = act(a @ w + bias [+ residual])
#   a:(M,K) bf16, w:(K,N) bf16 (BN scale pre-folded), bias:(1,N) f32,
#   residual:(M,N) bf16 -> out:(M,N) bf16.  Epilogue is done on the f32
#   accumulator, one cast on store (keeps VALU budget intact on v5e).
# --------------------------------------------------------------------------
def _mm_fused_kernel(a_ref, w_ref, b_ref, *rest, act, has_res):
    if has_res:
        r_ref, o_ref = rest
    else:
        (o_ref,) = rest
    acc = jnp.dot(a_ref[...], w_ref[...], preferred_element_type=jnp.float32)
    acc = acc + b_ref[...]
    if has_res:
        acc = acc + r_ref[...].astype(jnp.float32)
    if act == "relu":
        acc = jnp.maximum(acc, 0.0)
    o_ref[...] = acc.astype(o_ref.dtype)


def matmul_fused(a, w, bias, residual=None, *, act="none"):
    M, K = a.shape
    N = w.shape[1]
    has_res = residual is not None

    # ---- N tiling (N is a multiple of 128 by construction -> lane-dense) ----
    if N <= 512:
        tn = N
    else:
        tn = 512 if N % 512 == 0 else (256 if N % 256 == 0 else 128)

    # ---- M tiling: avoid padding/slicing whenever possible ----
    if M % 128 == 0:
        tm, Mp = 128, M
    elif M <= 512:
        tm, Mp = M, M                       # single full-extent block, no pad
    else:
        tm, Mp = 128, ((M + 127) // 128) * 128

    gm, gn = Mp // tm, N // tn
    # Give megacore (v7x: 2 TensorCores) at least 2 parallel tiles when we can.
    if gm * gn == 1 and tm >= 32 and tm % 32 == 0:
        tm //= 2
        gm = 2

    if Mp != M:
        a = jnp.pad(a, ((0, Mp - M), (0, 0)))
        if has_res:
            residual = jnp.pad(residual, ((0, Mp - M), (0, 0)))

    in_specs = [
        pl.BlockSpec((tm, K), lambda i, j: (i, 0)),    # activation patches
        pl.BlockSpec((K, tn), lambda i, j: (0, j)),    # folded conv+BN weight
        pl.BlockSpec((1, tn), lambda i, j: (0, j)),    # folded BN bias
    ]
    args = [a, w, bias]
    if has_res:
        in_specs.append(pl.BlockSpec((tm, tn), lambda i, j: (i, j)))
        args.append(residual)

    # Size the scoped-VMEM request from actual buffer needs (double-buffered),
    # capped at 48 MiB so there is headroom on v7x's 64 MiB physical VMEM.
    per_buf = tm * K * 2 + K * tn * 2 + tm * tn * 2 + tn * 4
    if has_res:
        per_buf += tm * tn * 2
    vmem = int(min(48 * 1024 * 1024, max(16 * 1024 * 1024, 4 * per_buf)))

    out = pl.pallas_call(
        functools.partial(_mm_fused_kernel, act=act, has_res=has_res),
        out_shape=jax.ShapeDtypeStruct((Mp, N), jnp.bfloat16),
        grid=(gm, gn),
        in_specs=in_specs,
        out_specs=pl.BlockSpec((tm, tn), lambda i, j: (i, j)),
        compiler_params=pltpu.CompilerParams(
            dimension_semantics=("parallel", "parallel"),
            vmem_limit_bytes=vmem,
        ),
    )(*args)
    return out if Mp == M else out[:M]


# --------------------------------------------------------------------------
# Conv = im2col glue + fused Pallas matmul (BN folded, optional residual fused)
# --------------------------------------------------------------------------
@functools.partial(jax.jit, static_argnames=("k", "stride", "padding", "act"))
def conv2d(x, w, b, residual, *, k, stride, padding, act):
    B, H, W, Cin = x.shape
    N = w.shape[1]
    Ho = (H + 2 * padding - k) // stride + 1
    Wo = (W + 2 * padding - k) // stride + 1
    if k == 1 and stride == 1 and padding == 0:
        a = x.reshape(B * H * W, Cin)
    else:
        xp = (jnp.pad(x, ((0, 0), (padding, padding), (padding, padding), (0, 0)))
              if padding else x)
        taps = []
        for i in range(k):
            for j in range(k):
                taps.append(xp[:, i:i + stride * (Ho - 1) + 1:stride,
                                  j:j + stride * (Wo - 1) + 1:stride, :])
        patches = taps[0] if len(taps) == 1 else jnp.concatenate(taps, axis=-1)
        a = patches.reshape(B * Ho * Wo, k * k * Cin)
        # TODO(synk): fuse the im2col tap extraction into the matmul kernel
        # (K-grid over taps / input fusion) to avoid the k*k activation
        # blow-up in HBM; kept as bf16 XLA glue here for lowering robustness.
    res = None if residual is None else residual.reshape(B * Ho * Wo, N)
    out = matmul_fused(a, w, b, res, act=act)
    return out.reshape(B, Ho, Wo, N)


def _apply_conv(x, conv, *, stride, padding, act, residual=None):
    return conv2d(x, conv["w"], conv["b"], residual,
                  k=conv["k"], stride=stride, padding=padding, act=act)


# --------------------------------------------------------------------------
# MaxPool2d(kernel=3, stride=2, padding=1), NHWC, tiled over output rows
# --------------------------------------------------------------------------
def _max9_kernel(x_ref, o_ref):
    acc = x_ref[0]
    for i in range(1, 9):
        acc = jnp.maximum(acc, x_ref[i])
    o_ref[...] = acc


def _row_tile(r):
    for t in (1024, 512, 256, 128, 64, 32, 16):
        if r >= t and r % t == 0:
            return t
    return r


@jax.jit
def maxpool_3x3_s2_p1(x):
    B, H, W, C = x.shape
    Ho = (H + 2 - 3) // 2 + 1
    Wo = (W + 2 - 3) // 2 + 1
    neg = float(jnp.finfo(x.dtype).min)
    xp = jnp.pad(x, ((0, 0), (1, 1), (1, 1), (0, 0)), constant_values=neg)
    views = [xp[:, i:i + 2 * (Ho - 1) + 1:2, j:j + 2 * (Wo - 1) + 1:2, :]
             for i in range(3) for j in range(3)]
    # TODO(synk): window the padded map directly inside the kernel instead of
    # materializing the 9 shifted views in HBM.
    stk = jnp.stack(views, axis=0).reshape(9, B * Ho * Wo, C)
    R = B * Ho * Wo
    tr = _row_tile(R)
    out = pl.pallas_call(
        _max9_kernel,
        out_shape=jax.ShapeDtypeStruct((R, C), x.dtype),
        grid=(R // tr,),
        in_specs=[pl.BlockSpec((9, tr, C), lambda i: (0, i, 0))],
        out_specs=pl.BlockSpec((tr, C), lambda i: (i, 0)),
        compiler_params=pltpu.CompilerParams(
            dimension_semantics=("parallel",)),
    )(stk)
    return out.reshape(B, Ho, Wo, C)


# --------------------------------------------------------------------------
# Fused tail: global avg-pool -> fc -> GELU -> head -> LogSoftmax (one kernel)
# --------------------------------------------------------------------------
_SQRT_HALF = 0.7071067811865476


def _erf_f32(x):
    # Abramowitz & Stegun 7.1.26 polynomial erf (float32-exact) -- matches
    # torch.nn.GELU(approximate='none').
    a1, a2, a3, a4, a5 = 0.254829592, -0.284496736, 1.421413741, -1.453152027, 1.061405429
    p = 0.3275911
    s = jnp.where(x >= 0.0, 1.0, -1.0)
    ax = jnp.abs(x)
    t = 1.0 / (1.0 + p * ax)
    poly = ((((a5 * t + a4) * t + a3) * t + a2) * t + a1) * t
    return s * (1.0 - poly * jnp.exp(-ax * ax))


def _tail_kernel(x_ref, wfc_ref, bfc_ref, wh_ref, bh_ref, o_ref):
    x = x_ref[...].astype(jnp.float32)                      # (B, HW, C)
    hw = x_ref.shape[1]
    pooled = jnp.sum(x, axis=1) * (1.0 / float(hw))         # global average pool
    feats = jnp.dot(pooled.astype(jnp.bfloat16), wfc_ref[...],
                    preferred_element_type=jnp.float32) + bfc_ref[...]
    g = 0.5 * feats * (1.0 + _erf_f32(feats * _SQRT_HALF))  # exact GELU
    logits = jnp.dot(g.astype(jnp.bfloat16), wh_ref[...],
                     preferred_element_type=jnp.float32) + bh_ref[...]
    col = lax.broadcasted_iota(jnp.int32, logits.shape, 1)
    logits = jnp.where(col < NUM_CLASSES, logits, -1e30)    # mask padded classes
    m = jnp.max(logits, axis=-1, keepdims=True)
    lse = m + jnp.log(jnp.sum(jnp.exp(logits - m), axis=-1, keepdims=True))
    o_ref[...] = logits - lse                               # LogSoftmax


@jax.jit
def tail_head(x, fc_w, fc_b, head_w, head_b):
    B, H, W, C = x.shape
    x2 = x.reshape(B, H * W, C)
    NH = head_w.shape[1]
    out = pl.pallas_call(
        _tail_kernel,
        out_shape=jax.ShapeDtypeStruct((B, NH), jnp.float32),
    )(x2, fc_w, fc_b, head_w, head_b)
    return out[:, :NUM_CLASSES]


# --------------------------------------------------------------------------
# Parameters (deterministic, synthetic).  BN is folded into weights/bias,
# weights are pre-transposed to (k*k*Cin_pad, Cout_pad) bf16, channels are
# zero-padded to multiples of 128 (padded channels stay exactly zero).
# --------------------------------------------------------------------------
class KeyGen:
    def __init__(self, seed=0):
        self._base = jax.random.PRNGKey(seed)
        self._i = 0

    def __call__(self):
        k = jax.random.fold_in(self._base, self._i)
        self._i += 1
        return k


def _cpad(c):
    return ((c + 127) // 128) * 128


def _conv_init(kg, cout, cin, k, relu_follows):
    fan_in = cin * k * k
    std = math.sqrt((2.0 if relu_follows else 1.0) / fan_in)
    return (std * jax.random.normal(kg(), (cout, cin, k, k))).astype(jnp.float32)


def _bn_fold(cout):
    eps = 1e-5
    gamma = jnp.ones((cout,), jnp.float32)
    beta = jnp.zeros((cout,), jnp.float32)
    mean = jnp.zeros((cout,), jnp.float32)
    var = jnp.ones((cout,), jnp.float32)
    scale = gamma / jnp.sqrt(var + eps)
    bias = beta - mean * scale
    return scale, bias


def _prep_conv(kg, cin_real, cin_pad, cout_real, k, relu_follows):
    cout_pad = _cpad(cout_real)
    w = _conv_init(kg, cout_real, cin_real, k, relu_follows)   # (Co,Ci,k,k)
    scale, bias = _bn_fold(cout_real)
    w = w * scale[:, None, None, None]                         # fold BN scale
    w = jnp.transpose(w, (2, 3, 1, 0))                         # (k,k,Ci,Co)
    w = jnp.pad(w, ((0, 0), (0, 0),
                    (0, cin_pad - cin_real), (0, cout_pad - cout_real)))
    return {
        "w": w.reshape(k * k * cin_pad, cout_pad).astype(jnp.bfloat16),
        "b": jnp.pad(bias, (0, cout_pad - cout_real)).reshape(1, cout_pad)
                .astype(jnp.float32),
        "k": k,
    }


def make_resnet50_params(kg):
    P = {}
    P["conv1"] = _prep_conv(kg, 3, 3, 64, 7, True)
    inplanes_real = 64
    inplanes_pad = P["conv1"]["w"].shape[1]            # 128
    layers = []
    for planes, nblocks, stride in [(64, 3, 1), (128, 4, 2), (256, 6, 2), (512, 3, 2)]:
        blocks = []
        for bi in range(nblocks):
            s = stride if bi == 0 else 1
            blk = {"stride": s}
            blk["c1"] = _prep_conv(kg, inplanes_real, inplanes_pad, planes, 1, True)
            planes_pad = blk["c1"]["w"].shape[1]
            blk["c2"] = _prep_conv(kg, planes, planes_pad, planes, 3, True)
            blk["c3"] = _prep_conv(kg, planes, planes_pad, planes * 4, 1, False)
            if s != 1 or inplanes_real != planes * 4:
                blk["down"] = _prep_conv(kg, inplanes_real, inplanes_pad,
                                         planes * 4, 1, False)
            blocks.append(blk)
            inplanes_real = planes * 4
            inplanes_pad = blk["c3"]["w"].shape[1]
        layers.append(blocks)
    P["layers"] = layers

    # fc: 2048 -> 1000 (padded to 1024 with zero columns / zero bias)
    fc_w = (jax.random.normal(kg(), (2048, 1000)) / math.sqrt(2048.0)).astype(jnp.float32)
    fc_b = (0.01 * jax.random.normal(kg(), (1000,))).astype(jnp.float32)
    P["fc_w"] = jnp.pad(fc_w, ((0, 0), (0, 24))).astype(jnp.bfloat16)
    P["fc_b"] = jnp.pad(fc_b, (0, 24)).reshape(1, 1024).astype(jnp.float32)

    # head: 1000 -> 26 (rows padded to 1024, cols padded to 128; padded
    # classes are masked inside the tail kernel before the LogSoftmax)
    head_w = (jax.random.normal(kg(), (1000, NUM_CLASSES)) / math.sqrt(1000.0)).astype(jnp.float32)
    head_b = (0.01 * jax.random.normal(kg(), (NUM_CLASSES,))).astype(jnp.float32)
    P["head_w"] = jnp.pad(head_w, ((0, 24), (0, 128 - NUM_CLASSES))).astype(jnp.bfloat16)
    P["head_b"] = jnp.pad(head_b, (0, 128 - NUM_CLASSES)).reshape(1, 128).astype(jnp.float32)
    return P


# --------------------------------------------------------------------------
# Forward pass (ResNet50 + GELU -> Linear -> LogSoftmax)
# --------------------------------------------------------------------------
def resnet_forward(x_nchw, P):
    # layout: convert PyTorch NCHW input to NHWC bf16 for all internal compute.
    x = jnp.transpose(x_nchw, (0, 2, 3, 1)).astype(jnp.bfloat16)

    # stem
    x = _apply_conv(x, P["conv1"], stride=2, padding=3, act="relu")
    x = maxpool_3x3_s2_p1(x)

    # bottleneck stages (residual add + ReLU fused into the conv3 epilogue)
    for blocks in P["layers"]:
        for blk in blocks:
            s = blk["stride"]
            identity = x
            out = _apply_conv(x, blk["c1"], stride=1, padding=0, act="relu")
            out = _apply_conv(out, blk["c2"], stride=s, padding=1, act="relu")
            if "down" in blk:
                identity = _apply_conv(x, blk["down"], stride=s, padding=0,
                                       act="none")
            x = _apply_conv(out, blk["c3"], stride=1, padding=0, act="relu",
                            residual=identity)

    # fused tail: avgpool -> fc -> GELU -> head -> LogSoftmax
    return tail_head(x, P["fc_w"], P["fc_b"], P["head_w"], P["head_b"])


# --------------------------------------------------------------------------
if __name__ == "__main__":
    kg = KeyGen(0)
    params = make_resnet50_params(kg)

    x = jax.random.normal(jax.random.PRNGKey(0), (2, 3, 32, 32), dtype=jnp.float32)

    out = resnet_forward(x, params)
    out = jax.block_until_ready(out)

    assert out.shape == (2, NUM_CLASSES), out.shape
    assert bool(jnp.all(jnp.isfinite(out)))
    probs_sum = jnp.sum(jnp.exp(out), axis=-1)
    assert bool(jnp.allclose(probs_sum, 1.0, atol=1e-3)), probs_sum

    print("KERNEL_OK")
</pallas_src>

<mosaic_0001>
module attributes {stable_mosaic.version = 11 : i64} {
  func.func @_mm_fused_kernel(%arg0: i32, %arg1: i32, %arg2: memref<128x147xbf16, #tpu.memory_space<vmem>>, %arg3: memref<147x128xbf16, #tpu.memory_space<vmem>>, %arg4: memref<1x128xf32, #tpu.memory_space<vmem>>, %arg5: memref<128x128xbf16, #tpu.memory_space<vmem>>) attributes {dimension_semantics = [#tpu.dimension_semantics<parallel>, #tpu.dimension_semantics<parallel>], iteration_bounds = array<i64: 4, 1>, scalar_prefetch = 0 : i64, scratch_operands = 0 : i64, tpu.core_type = #tpu.core_type<tc>, window_params = [{transform_indices = @transform_0, window_bounds = array<i64: 128, 147>}, {transform_indices = @transform_1, window_bounds = array<i64: 147, 128>}, {transform_indices = @transform_2, window_bounds = array<i64: 1, 128>}, {transform_indices = @transform_3, window_bounds = array<i64: 128, 128>}]} {
    %c0 = arith.constant 0 : index
    %c0_0 = arith.constant 0 : index
    %0 = vector.load %arg2[%c0, %c0_0] : memref<128x147xbf16, #tpu.memory_space<vmem>>, vector<128x147xbf16>
    %c0_1 = arith.constant 0 : index
    %c0_2 = arith.constant 0 : index
    %1 = vector.load %arg3[%c0_1, %c0_2] : memref<147x128xbf16, #tpu.memory_space<vmem>>, vector<147x128xbf16>
    %cst = arith.constant dense<0.000000e+00> : vector<128x128xf32>
    %2 = tpu.matmul %0, %1, %cst {dimension_numbers = #tpu.dot_dimension_numbers<[1], [0], [0], [1], [0, 0, 1, 1], [], []>} : vector<128x147xbf16>, vector<147x128xbf16>, vector<128x128xf32> -> vector<128x128xf32>
    %c0_3 = arith.constant 0 : index
    %c0_4 = arith.constant 0 : index
    %3 = vector.load %arg4[%c0_3, %c0_4] : memref<1x128xf32, #tpu.memory_space<vmem>>, vector<1x128xf32>
    %4 = vector.broadcast %3 : vector<1x128xf32> to vector<128x128xf32>
    %5 = arith.addf %2, %4 : vector<128x128xf32>
    %cst_5 = arith.constant 0.000000e+00 : f32
    %6 = vector.broadcast %cst_5 : f32 to vector<128x128xf32>
    %7 = arith.maximumf %5, %6 : vector<128x128xf32>
    %8 = arith.truncf %7 : vector<128x128xf32> to vector<128x128xbf16>
    %c0_6 = arith.constant 0 : index
    %c0_7 = arith.constant 0 : index
    %9 = vector.load %arg5[%c0_6, %c0_7] : memref<128x128xbf16, #tpu.memory_space<vmem>>, vector<128x128xbf16>
    tpu.vector_store %arg5[%c0_6, %c0_7], %8 {strides = array<i32>} : memref<128x128xbf16, #tpu.memory_space<vmem>>, vector<128x128xbf16>,
    return
  }
  func.func @transform_0(%arg0: i32, %arg1: i32) -> (i32, i32) {
    %c0_i32 = arith.constant 0 : i32
    %c0_i32_0 = arith.constant 0 : i32
    return %arg0, %c0_i32 : i32, i32
  }
  func.func @transform_1(%arg0: i32, %arg1: i32) -> (i32, i32) {
    %c0_i32 = arith.constant 0 : i32
    %c0_i32_0 = arith.constant 0 : i32
    return %c0_i32, %arg1 : i32, i32
  }
  func.func @transform_2(%arg0: i32, %arg1: i32) -> (i32, i32) {
    %c0_i32 = arith.constant 0 : i32
    %c0_i32_0 = arith.constant 0 : i32
    return %c0_i32, %arg1 : i32, i32
  }
  func.func @transform_3(%arg0: i32, %arg1: i32) -> (i32, i32) {
    %c0_i32 = arith.constant 0 : i32
    return %arg0, %arg1 : i32, i32
  }
}

</mosaic_0001>

<llo_original>
// kernel: conv2d.1
$region0: #{conv2d.1}
  #allocation0 [shape = 'u32[]', space=smem, size = 0x4, offset = 0x4, fixed_abs, tag = 'smem constant byte address 0x4 - core index']
  #allocation1 [shape = 'u32[72,128]{1,0:T(1,128)}', space=vmem, size = 0x9000, scoped, tag = 'internal scratch']
  %s0 = inlined_call_operand.vmem [shape: bf16[512,147], index: 0, kind: input, shape index: {}]
  %s1 = inlined_call_operand.vmem [shape: bf16[147,128], index: 1, kind: input, shape index: {}]
  %s2 = inlined_call_operand.vmem [shape: f32[1,128], index: 2, kind: input, shape index: {}]
  %s3 = inlined_call_operand.hbm [shape: bf16[512,128], index: 3, kind: output, shape index: {}]
  %s4 = sld [smem:[#allocation0]]
  $region45: #{conv2d.1} parent=0
    _
  %s6 = ssub.s32 1, %s4
  %s7 = scalar_select 0, %s6, %s4
  $region1: #{conv2d.1} parent=0
    #allocation2 [shape = 'u8[65536]{0}', space=vmem, size = 0x10000, scoped, tag = 'output window, operand 0']
    #allocation3 [shape = 's32[2]{0}', space=sflag, size = 0x8, scoped, tag = 'scoped memory for conv2d.1']
    %8 = vsyncpa [#allocation3], 0
    %s9 = scalar_lea.sflag [#allocation3], 1
    %10 = vsyncpa %s9, 0
    loop: start=0, step=1, limit=6
    $region2: #{conv2d.1} parent=1 // loop_pre_header
      _
    $region3: #{conv2d.1} parent=1 // loop_header
      %s12 = sphi 0, %s16
      %p13 = scmp.ge.s32.totalorder %s12, 6
      %s19 = sphi 0, %s31
      %s20 = sphi 0, %s27
      %s21 = sphi 0, %s19
      %s22 = sphi 0, %s20
      %s23 = sphi 0, %s21
      %s24 = sphi 0, %s22
      %s34 = sphi 0, %s36
      %s37 = sphi 0, %s34
      %s38 = sphi 0, %s37
      %s54 = sphi 0, %s38
      %s60 = sphi 0, %s62
      %s63 = sphi 0, %s60
      %s64 = sphi 0, %s63
      %s80 = sphi 0, %s64
      %s86 = sphi 0, %s88
      %s89 = sphi 0, %s86
      %s90 = sphi 0, %s89
      %s106 = sphi 0, %s90
      %s114 = sphi 0, %s116
      %s117 = sphi 0, %s114
      %s118 = sphi 0, %s117
      %s134 = sphi 0, %s118
    $region4: #{conv2d.1} parent=1 // loop_header_branch
      %15 = sbr.rel (%p13) target = $region8
    $region5: #{conv2d.1} parent=1 // loop_body
      %s17 = ssub.s32 %s12, 1
      %s18 = ssub.s32 %s12, 2
      %s25 = sadd.s32 1, %s20
      %p26 = scmp.ge.s32.totalorder %s25, 1
      %s27 = scalar_select %p26, 0, %s25
      %s28 = sadd.s32 1, %s19
      %s29 = scalar_select %p26, %s28, %s19
      %p30 = scmp.ge.s32.totalorder %s29, 4
      %s31 = scalar_select %p30, 0, %s29
      %s32 = ssub.s32 %s19, %s31
      %p33 = scmp.eq.s32.totalorder %s32, 0
      %s35 = sadd.s32 %s34, 1
      %s36 = scalar_select %p33, %s34, %s35
      %p39 = pneg %p33
      %p40 = scmp.eq.s32.totalorder %s12, 3
      %p41 = por %p39, %p40
      %p42 = scmp.ne.s32.totalorder %s34, %s37
      %p43 = scmp.eq.s32.totalorder %s12, 0
      %p44 = por %p42, %p43
      %p45 = scmp.ne.s32.totalorder %s34, %s37
      %p46 = scmp.eq.s32.totalorder %s17, 3
      %p47 = por %p45, %p46
      %p48 = scmp.ne.s32.totalorder %s37, %s38
      %p49 = scmp.eq.s32.totalorder %s17, 0
      %p50 = por %p48, %p49
      %p51 = scmp.ne.s32.totalorder %s37, %s38
      %p52 = scmp.eq.s32.totalorder %s18, 3
      %p53 = por %p51, %p52
      %p55 = scmp.ne.s32.totalorder %s38, %s54
      %p56 = scmp.eq.s32.totalorder %s18, 0
      %p57 = por %p55, %p56
      %s58 = ssub.s32 %s20, %s27
      %p59 = scmp.eq.s32.totalorder %s58, 0
      %s61 = sadd.s32 %s60, 1
      %s62 = scalar_select %p59, %s60, %s61
      %p65 = pneg %p59
      %p66 = scmp.eq.s32.totalorder %s12, 3
      %p67 = por %p65, %p66
      %p68 = scmp.ne.s32.totalorder %s60, %s63
      %p69 = scmp.eq.s32.totalorder %s12, 0
      %p70 = por %p68, %p69
      %p71 = scmp.ne.s32.totalorder %s60, %s63
      %p72 = scmp.eq.s32.totalorder %s17, 3
      %p73 = por %p71, %p72
      %p74 = scmp.ne.s32.totalorder %s63, %s64
      %p75 = scmp.eq.s32.totalorder %s17, 0
      %p76 = por %p74, %p75
      %p77 = scmp.ne.s32.totalorder %s63, %s64
      %p78 = scmp.eq.s32.totalorder %s18, 3
      %p79 = por %p77, %p78
      %p81 = scmp.ne.s32.totalorder %s64, %s80
      %p82 = scmp.eq.s32.totalorder %s18, 0
      %p83 = por %p81, %p82
      %s84 = ssub.s32 %s20, %s27
      %p85 = scmp.eq.s32.totalorder %s84, 0
      %s87 = sadd.s32 %s86, 1
      %s88 = scalar_select %p85, %s86, %s87
      %p91 = pneg %p85
      %p92 = scmp.eq.s32.totalorder %s12, 3
      %p93 = por %p91, %p92
      %p94 = scmp.ne.s32.totalorder %s86, %s89
      %p95 = scmp.eq.s32.totalorder %s12, 0
      %p96 = por %p94, %p95
      %p97 = scmp.ne.s32.totalorder %s86, %s89
      %p98 = scmp.eq.s32.totalorder %s17, 3
      %p99 = por %p97, %p98
      %p100 = scmp.ne.s32.totalorder %s89, %s90
      %p101 = scmp.eq.s32.totalorder %s17, 0
      %p102 = por %p100, %p101
      %p103 = scmp.ne.s32.totalorder %s89, %s90
      %p104 = scmp.eq.s32.totalorder %s18, 3
      %p105 = por %p103, %p104
      %p107 = scmp.ne.s32.totalorder %s90, %s106
      %p108 = scmp.eq.s32.totalorder %s18, 0
      %p109 = por %p107, %p108
      %s110 = ssub.s32 %s19, %s31
      %s111 = ssub.s32 %s20, %s27
      %s112 = sor.u32 %s110, %s111
      %p113 = scmp.eq.s32.totalorder %s112, 0
      %s115 = sadd.s32 %s114, 1
      %s116 = scalar_select %p113, %s114, %s115
      %p119 = pneg %p113
      %p120 = scmp.eq.s32.totalorder %s12, 3
      %p121 = por %p119, %p120
      %p122 = scmp.ne.s32.totalorder %s114, %s117
      %p123 = scmp.eq.s32.totalorder %s12, 0
      %p124 = por %p122, %p123
      %p125 = scmp.ne.s32.totalorder %s114, %s117
      %p126 = scmp.eq.s32.totalorder %s17, 3
      %p127 = por %p125, %p126
      %p128 = scmp.ne.s32.totalorder %s117, %s118
      %p129 = scmp.eq.s32.totalorder %s17, 0
      %p130 = por %p128, %p129
      %p131 = scmp.ne.s32.totalorder %s117, %s118
      %p132 = scmp.eq.s32.totalorder %s18, 3
      %p133 = por %p131, %p132
      %p135 = scmp.ne.s32.totalorder %s118, %s134
      %p136 = scmp.eq.s32.totalorder %s18, 0
      %p137 = por %p135, %p136
      %p138 = scmp.le.s32.totalorder 1, %s12
      %p139 = scmp.lt.s32.totalorder %s12, 5
      %p140 = pnand %p138, %p139
      %p141 = pneg %p140
      // Predicated region
      $region9: #{conv2d.1} parent=5 // pred_check
        _
      $region10: #{conv2d.1} parent=5 // pred_check_branch
        %143 = sbr.rel (%p140) target = $region12
      $region11: #{conv2d.1} parent=5 // pred_region
        %s144 = ssub.s32 %s12, 1
        // Predicated region
        $region13: #{conv2d.1} parent=11 // pred_check
          %p145 = pneg %p76
        $region14: #{conv2d.1} parent=11 // pred_check_branch
          %147 = sbr.rel (%p145) target = $region16
        $region15: #{conv2d.1} parent=11 // pred_region
          %p148 = scmp.lt.s32.totalorder %s22, 0
          %s149 = scalar_select %p148, %s22, 0
          %s150 = smul.addr %s149, 4
          %s151 = scalar_lea.vmem %s1, %s150
        $region16: #{conv2d.1} parent=11 // pred_fallthru
          _
        // Predicated region
        $region17: #{conv2d.1} parent=11 // pred_check
          %p152 = pneg %p102
        $region18: #{conv2d.1} parent=11 // pred_check_branch
          %154 = sbr.rel (%p152) target = $region20
        $region19: #{conv2d.1} parent=11 // pred_region
          %p155 = scmp.lt.s32.totalorder %s22, 0
          %s156 = scalar_select %p155, %s22, 0
          %s157 = scalar_lea.vmem %s2, %s156
        $region20: #{conv2d.1} parent=11 // pred_fallthru
          _
      $region12: #{conv2d.1} parent=5 // pred_fallthru
        _
      %p158 = scmp.lt.s32.totalorder %s12, 4
      // Predicated region
      $region21: #{conv2d.1} parent=5 // pred_check
        %p159 = pneg %p158
      $region22: #{conv2d.1} parent=5 // pred_check_branch
        %161 = sbr.rel (%p159) target = $region24
      $region23: #{conv2d.1} parent=5 // pred_region
        // Predicated region
        $region25: #{conv2d.1} parent=23 // pred_check
          %p162 = pneg %p44
        $region26: #{conv2d.1} parent=23 // pred_check_branch
          %164 = sbr.rel (%p162) target = $region28
        $region27: #{conv2d.1} parent=23 // pred_region
          %s165 = smul.u32 16, %s19
          %p166 = scmp.lt.s32.totalorder %s165, 63
          %s167 = scalar_select %p166, %s165, 63
          %s168 = smul.addr %s167, 2
          %s169 = smul.addr %s168, 4
          %s170 = scalar_lea.vmem %s0, %s169
          %s171 = smul.u32 16, %s19
        $region28: #{conv2d.1} parent=23 // pred_fallthru
          _
      $region24: #{conv2d.1} parent=5 // pred_fallthru
        _
      %p172 = scmp.le.s32.totalorder 1, %s12
      %p173 = scmp.lt.s32.totalorder %s12, 5
      %p174 = pnand %p172, %p173
      %p175 = pneg %p174
      // Predicated region
      $region29: #{conv2d.1} parent=5 // pred_check
        _
      $region30: #{conv2d.1} parent=5 // pred_check_branch
        %177 = sbr.rel (%p174) target = $region32
      $region31: #{conv2d.1} parent=5 // pred_region
        %s178 = ssub.s32 %s12, 1
        %s179 = smul.u32 16, %s21
        %p180 = scmp.lt.s32.totalorder %s179, 63
        %s181 = scalar_select %p180, %s179, 63
        %s182 = smul.addr %s181, 2
        %s183 = smul.addr %s182, 4
        %s184 = scalar_lea.vmem %s0, %s183
        %p185 = pneg %p50
        %p186 = pneg %p47
        %p187 = scmp.lt.s32.totalorder %s22, 0
        %s188 = scalar_select %p187, %s22, 0
        %s189 = smul.addr %s188, 4
        %s190 = scalar_lea.vmem %s1, %s189
        %p191 = pneg %p76
        %p192 = pneg %p73
        %p193 = scmp.lt.s32.totalorder %s22, 0
        %s194 = scalar_select %p193, %s22, 0
        %s195 = scalar_lea.vmem %s2, %s194
        %p196 = pneg %p102
        %p197 = pneg %p99
        %p198 = pneg %p130
        %p199 = pneg %p127
        %s200 = sand.u32 %s117, 1
        %s201 = scalar_lea.sflag [#allocation3], %s200
        %s202 = sand.u32 %s117, 1
        %s203 = smul.addr %s202, 64
        %s204 = scalar_lea.vmem [#allocation2], %s203
        %s205 = smul.u32 16, %s21
        %p206 = scmp.lt.s32.totalorder %s205, 63
        %s207 = scalar_select %p206, %s205, 63
        %s208 = smul.addr %s207, 2
        %s209 = smul.addr %s208, 4
        %s210 = scalar_lea.vmem %s0, %s209
        %s211 = smul.u32 16, %s21
        %p212 = scmp.lt.s32.totalorder %s22, 0
        %s213 = scalar_select %p212, %s22, 0
        %s214 = smul.addr %s213, 4
        %s215 = scalar_lea.vmem %s1, %s214
        %p216 = scmp.lt.s32.totalorder %s22, 0
        %s217 = scalar_select %p216, %s22, 0
        %s218 = scalar_lea.vmem %s2, %s217
        %s219 = smul.u32 16, %s21
        %v221 = vld [vmem:[%s210] sm:$0xff]
        %v222 = vld [vmem:[%s210 + $0x8] sm:$0xff]
        %v223 = vld [vmem:[%s210 + $0x10] sm:$0xff]
        %v224 = vld [vmem:[%s210 + $0x18] sm:$0xff]
        %v225 = vld [vmem:[%s210 + $0x20] sm:$0xff]
        %v226 = vld [vmem:[%s210 + $0x28] sm:$0xff]
        %v227 = vld [vmem:[%s210 + $0x30] sm:$0xff]
        %v228 = vld [vmem:[%s210 + $0x38] sm:$0xff]
        %v229 = vld [vmem:[%s210 + $0x40] sm:$0xff]
        %v230 = vld [vmem:[%s210 + $0x48] sm:$0xff]
        %v231 = vld [vmem:[%s210 + $0x50] sm:$0xff]
        %v232 = vld [vmem:[%s210 + $0x58] sm:$0xff]
        %v233 = vld [vmem:[%s210 + $0x60] sm:$0xff]
        %v234 = vld [vmem:[%s210 + $0x68] sm:$0xff]
        %v235 = vld [vmem:[%s210 + $0x70] sm:$0xff]
        %v236 = vld [vmem:[%s210 + $0x78] sm:$0xff]
        %v237 = vld [vmem:[%s215] sm:$0xf]
        %v238 = vld [vmem:[%s215 + $0x4] sm:$0xf]
        %v239 = vld [vmem:[%s215 + $0x8] sm:$0xf]
        %v240 = vld [vmem:[%s215 + $0xc] sm:$0xf]
        %v241 = vld [vmem:[%s215 + $0x10] sm:$0xf]
        %v242 = vld [vmem:[%s215 + $0x14] sm:$0xf]
        %v243 = vld [vmem:[%s215 + $0x18] sm:$0xf]
        %v244 = vld [vmem:[%s215 + $0x1c] sm:$0xf]
        %v245 = vld [vmem:[%s215 + $0x20] sm:$0xf]
        %v246 = vld [vmem:[%s215 + $0x24] sm:$0xf]
        %v247 = vld [vmem:[%s215 + $0x28] sm:$0xf]
        %v248 = vld [vmem:[%s215 + $0x2c] sm:$0xf]
        %v249 = vld [vmem:[%s215 + $0x30] sm:$0xf]
        %v250 = vld [vmem:[%s215 + $0x34] sm:$0xf]
        %v251 = vld [vmem:[%s215 + $0x38] sm:$0xf]
        %v252 = vld [vmem:[%s215 + $0x3c] sm:$0xf]
        %v253 = vld [vmem:[%s215 + $0x40] sm:$0xf]
        %v254 = vld [vmem:[%s215 + $0x44] sm:$0xf]
        %v255 = vld [vmem:[%s215 + $0x48] sm:$0x3]
        %v256 = vld [vmem:[%s218] sm:$0x1]
        %v258 = vperm.slane %v256, 0
        %v276 = vunpack.c.l.b16 %v221
        %v277 = vunpack.c.h.b16 %v221
        %v278 = vunpack.c.l.b16 %v222
        %v279 = vunpack.c.h.b16 %v222
        %v280 = vunpack.c.l.b16 %v223
        %v281 = vunpack.c.h.b16 %v223
        %v282 = vunpack.c.l.b16 %v224
        %v283 = vunpack.c.h.b16 %v224
        %v284 = vunpack.c.l.b16 %v225
        %v285 = vunpack.c.h.b16 %v225
        %v286 = vunpack.c.l.b16 %v226
        %v287 = vunpack.c.h.b16 %v226
        %v288 = vunpack.c.l.b16 %v227
        %v289 = vunpack.c.h.b16 %v227
        %v290 = vunpack.c.l.b16 %v228
        %v291 = vunpack.c.h.b16 %v228
        %v292 = vunpack.c.l.b16 %v229
        %v293 = vunpack.c.h.b16 %v229
        %v294 = vunpack.c.l.b16 %v230
        %v295 = vunpack.c.h.b16 %v230
        %v296 = vunpack.c.l.b16 %v231
        %v297 = vunpack.c.h.b16 %v231
        %v298 = vunpack.c.l.b16 %v232
        %v299 = vunpack.c.h.b16 %v232
        %v300 = vunpack.c.l.b16 %v233
        %v301 = vunpack.c.h.b16 %v233
        %v302 = vunpack.c.l.b16 %v234
        %v303 = vunpack.c.h.b16 %v234
        %v304 = vunpack.c.l.b16 %v235
        %v305 = vunpack.c.h.b16 %v235
        %v306 = vunpack.c.l.b16 %v236
        %v307 = vunpack.c.h.b16 %v236
        %v308 = vpack.c.b16 %v278, %v276
        %v309 = vpack.c.b16 %v279, %v277
        %v310 = vpack.c.b16 %v282, %v280
        %v311 = vpack.c.b16 %v283, %v281
        %v312 = vpack.c.b16 %v286, %v284
        %v313 = vpack.c.b16 %v287, %v285
        %v314 = vpack.c.b16 %v290, %v288
        %v315 = vpack.c.b16 %v291, %v289
        %v316 = vpack.c.b16 %v294, %v292
        %v317 = vpack.c.b16 %v295, %v293
        %v318 = vpack.c.b16 %v298, %v296
        %v319 = vpack.c.b16 %v299, %v297
        %v320 = vpack.c.b16 %v302, %v300
        %v321 = vpack.c.b16 %v303, %v301
        %v322 = vpack.c.b16 %v306, %v304
        %v323 = vpack.c.b16 %v307, %v305
        %v351 = vunpack.c.l.b16 %v237
        %v352 = vunpack.c.l.b16 %v238
        %v353 = vunpack.c.l.b16 %v239
        %v354 = vunpack.c.l.b16 %v240
        %v355 = vunpack.c.l.b16 %v241
        %v356 = vunpack.c.l.b16 %v242
        %v357 = vunpack.c.l.b16 %v243
        %v358 = vunpack.c.l.b16 %v244
        %v359 = vunpack.c.l.b16 %v245
        %v360 = vunpack.c.l.b16 %v246
        %v361 = vunpack.c.l.b16 %v247
        %v362 = vunpack.c.l.b16 %v248
        %v363 = vunpack.c.l.b16 %v249
        %v364 = vunpack.c.l.b16 %v250
        %v365 = vunpack.c.l.b16 %v251
        %v366 = vunpack.c.l.b16 %v252
        %v367 = vunpack.c.l.b16 %v253
        %v368 = vunpack.c.l.b16 %v254
        %v369 = vunpack.c.l.b16 %v255
        %v370 = vpack.c.b16 %v352, %v351
        %v371 = vpack.c.b16 %v354, %v353
        %v372 = vpack.c.b16 %v356, %v355
        %v373 = vpack.c.b16 %v358, %v357
        %v374 = vpack.c.b16 %v360, %v359
        %v375 = vpack.c.b16 %v362, %v361
        %v376 = vpack.c.b16 %v364, %v363
        %v377 = vpack.c.b16 %v366, %v365
        %v378 = vpack.c.b16 %v368, %v367
        %v379 = vpack.c.b16 %v369, %v369
        %vm389 = vcmask 154624
        %v391 = vsel %vm389, %v309, 0
        %v394 = vsel %vm389, %v311, 0
        %v397 = vsel %vm389, %v313, 0
        %v400 = vsel %vm389, %v315, 0
        %v403 = vsel %vm389, %v317, 0
        %v406 = vsel %vm389, %v319, 0
        %v409 = vsel %vm389, %v321, 0
        %v412 = vsel %vm389, %v323, 0
        %vm414 = vcmask 1040384
        %vm415 = vcmask 1041408
        %v416 = vsel %vm414, 4294967295, 65535
        %v417 = vsel %vm415, %v416, 0
        %v419 = vand.u32 %v379, %v417
        %421 = vmatpush.bf16.msra.mxu0 %v377
        %422 = vmatpush.bf16.msra.mxu0 %v376
        %423 = vmatpush.bf16.msra.mxu0 %v375
        %424 = vmatpush.bf16.msra.mxu0 %v374
        %425 = vmatpush.bf16.msra.mxu0 %v373
        %426 = vmatpush.bf16.msra.mxu0 %v372
        %427 = vmatpush.bf16.msra.mxu0 %v371
        %428 = vmatpush.bf16.msra.mxu0 %v370
        %429 = vmatmul.bf16.gmra.mxu0 %v308
        %v430 = vpop.f32.mrf.mxu0
        %v431 = vadd.f32 %v258, %v430
        %v432 = vpop.f32.mrf.mxu0
        %v433 = vadd.f32 %v258, %v432
        %434 = vmatmul.bf16.gmra.mxu0 %v310
        %v435 = vpop.f32.mrf.mxu0
        %v436 = vadd.f32 %v258, %v435
        %v437 = vpop.f32.mrf.mxu0
        %v438 = vadd.f32 %v258, %v437
        %439 = vmatmul.bf16.gmra.mxu0 %v312
        %v440 = vpop.f32.mrf.mxu0
        %v441 = vadd.f32 %v258, %v440
        %v442 = vpop.f32.mrf.mxu0
        %v443 = vadd.f32 %v258, %v442
        %444 = vmatmul.bf16.gmra.mxu0 %v314
        %v445 = vpop.f32.mrf.mxu0
        %v446 = vadd.f32 %v258, %v445
        %v447 = vpop.f32.mrf.mxu0
        %v448 = vadd.f32 %v258, %v447
        %449 = vmatmul.bf16.gmra.mxu0 %v316
        %v450 = vpop.f32.mrf.mxu0
        %v451 = vadd.f32 %v258, %v450
        %v452 = vpop.f32.mrf.mxu0
        %v453 = vadd.f32 %v258, %v452
        %454 = vmatmul.bf16.gmra.mxu0 %v318
        %v455 = vpop.f32.mrf.mxu0
        %v456 = vadd.f32 %v258, %v455
        %v457 = vpop.f32.mrf.mxu0
        %v458 = vadd.f32 %v258, %v457
        %459 = vmatmul.bf16.gmra.mxu0 %v320
        %v460 = vpop.f32.mrf.mxu0
        %v461 = vadd.f32 %v258, %v460
        %v462 = vpop.f32.mrf.mxu0
        %v463 = vadd.f32 %v258, %v462
        %464 = vmatmul.bf16.gmra.mxu0 %v322
        %v465 = vpop.f32.mrf.mxu0
        %v466 = vadd.f32 %v258, %v465
        %v467 = vpop.f32.mrf.mxu0
        %v468 = vadd.f32 %v258, %v467
        %469 = vdwg.mxu0
        %470 = vmatpush.bf16.msra.mxu0 0
        %471 = vmatpush.bf16.msra.mxu0 0
        %472 = vmatpush.bf16.msra.mxu0 0
        %473 = vmatpush.bf16.msra.mxu0 0
        %474 = vmatpush.bf16.msra.mxu0 0
        %475 = vmatpush.bf16.msra.mxu0 0
        %476 = vmatpush.bf16.msra.mxu0 %v419
        %477 = vmatpush.bf16.msra.mxu0 %v378
        %478 = vmatmul.bf16.gmra.mxu0 %v391
        %v479 = vpop.f32.mrf.mxu0
        %v480 = vadd.f32 %v431, %v479
        %v481 = vpop.f32.mrf.mxu0
        %v482 = vadd.f32 %v433, %v481
        %483 = vmatmul.bf16.gmra.mxu0 %v394
        %v484 = vpop.f32.mrf.mxu0
        %v485 = vadd.f32 %v436, %v484
        %v486 = vpop.f32.mrf.mxu0
        %v487 = vadd.f32 %v438, %v486
        %488 = vmatmul.bf16.gmra.mxu0 %v397
        %v489 = vpop.f32.mrf.mxu0
        %v490 = vadd.f32 %v441, %v489
        %v491 = vpop.f32.mrf.mxu0
        %v492 = vadd.f32 %v443, %v491
        %493 = vmatmul.bf16.gmra.mxu0 %v400
        %v494 = vpop.f32.mrf.mxu0
        %v495 = vadd.f32 %v446, %v494
        %v496 = vpop.f32.mrf.mxu0
        %v497 = vadd.f32 %v448, %v496
        %498 = vmatmul.bf16.gmra.mxu0 %v403
        %v499 = vpop.f32.mrf.mxu0
        %v500 = vadd.f32 %v451, %v499
        %v501 = vpop.f32.mrf.mxu0
        %v502 = vadd.f32 %v453, %v501
        %503 = vmatmul.bf16.gmra.mxu0 %v406
        %v504 = vpop.f32.mrf.mxu0
        %v505 = vadd.f32 %v456, %v504
        %v506 = vpop.f32.mrf.mxu0
        %v507 = vadd.f32 %v458, %v506
        %508 = vmatmul.bf16.gmra.mxu0 %v409
        %v509 = vpop.f32.mrf.mxu0
        %v510 = vadd.f32 %v461, %v509
        %v511 = vpop.f32.mrf.mxu0
        %v512 = vadd.f32 %v463, %v511
        %513 = vmatmul.bf16.gmra.mxu0 %v412
        %v514 = vpop.f32.mrf.mxu0
        %v515 = vadd.f32 %v466, %v514
        %v516 = vpop.f32.mrf.mxu0
        %v517 = vadd.f32 %v468, %v516
        %518 = vdwg.mxu0
        %v519 = vmax.f32 %v480, 0.0
        %v520 = vmax.f32 %v482, 0.0
        %v521 = vmax.f32 %v485, 0.0
        %v522 = vmax.f32 %v487, 0.0
        %v523 = vmax.f32 %v490, 0.0
        %v524 = vmax.f32 %v492, 0.0
        %v525 = vmax.f32 %v495, 0.0
        %v526 = vmax.f32 %v497, 0.0
        %v527 = vmax.f32 %v500, 0.0
        %v528 = vmax.f32 %v502, 0.0
        %v529 = vmax.f32 %v505, 0.0
        %v530 = vmax.f32 %v507, 0.0
        %v531 = vmax.f32 %v510, 0.0
        %v532 = vmax.f32 %v512, 0.0
        %v533 = vmax.f32 %v515, 0.0
        %v534 = vmax.f32 %v517, 0.0
        %v535 = vpack.c.bf16 %v519, %v519
        %v536 = vpack.c.bf16 %v520, %v520
        %v537 = vpack.c.bf16 %v521, %v521
        %v538 = vpack.c.bf16 %v522, %v522
        %v539 = vpack.c.bf16 %v523, %v523
        %v540 = vpack.c.bf16 %v524, %v524
        %v541 = vpack.c.bf16 %v525, %v525
        %v542 = vpack.c.bf16 %v526, %v526
        %v543 = vpack.c.bf16 %v527, %v527
        %v544 = vpack.c.bf16 %v528, %v528
        %v545 = vpack.c.bf16 %v529, %v529
        %v546 = vpack.c.bf16 %v530, %v530
        %v547 = vpack.c.bf16 %v531, %v531
        %v548 = vpack.c.bf16 %v532, %v532
        %v549 = vpack.c.bf16 %v533, %v533
        %v550 = vpack.c.bf16 %v534, %v534
        %551 = vst [vmem:[%s204] sm:$0xf] %v535
        %552 = vst [vmem:[%s204 + $0x4] sm:$0xf] %v536
        %553 = vst [vmem:[%s204 + $0x8] sm:$0xf] %v537
        %554 = vst [vmem:[%s204 + $0xc] sm:$0xf] %v538
        %555 = vst [vmem:[%s204 + $0x10] sm:$0xf] %v539
        %556 = vst [vmem:[%s204 + $0x14] sm:$0xf] %v540
        %557 = vst [vmem:[%s204 + $0x18] sm:$0xf] %v541
        %558 = vst [vmem:[%s204 + $0x1c] sm:$0xf] %v542
        %559 = vst [vmem:[%s204 + $0x20] sm:$0xf] %v543
        %560 = vst [vmem:[%s204 + $0x24] sm:$0xf] %v544
        %561 = vst [vmem:[%s204 + $0x28] sm:$0xf] %v545
        %562 = vst [vmem:[%s204 + $0x2c] sm:$0xf] %v546
        %563 = vst [vmem:[%s204 + $0x30] sm:$0xf] %v547
        %564 = vst [vmem:[%s204 + $0x34] sm:$0xf] %v548
        %565 = vst [vmem:[%s204 + $0x38] sm:$0xf] %v549
        %566 = vst [vmem:[%s204 + $0x3c] sm:$0xf] %v550
        %s567 = sand.u32 %s117, 1
        %s568 = scalar_lea.sflag [#allocation3], %s567
        %s569 = sand.u32 %s117, 1
        %s570 = smul.addr %s569, 64
        %s571 = scalar_lea.vmem [#allocation2], %s570
        // Predicated region
        $region33: #{conv2d.1} parent=31 // pred_check
          %p572 = pneg %p127
        $region34: #{conv2d.1} parent=31 // pred_check_branch
          %574 = sbr.rel (%p572) target = $region36
        $region35: #{conv2d.1} parent=31 // pred_region
          %s575 = smul.u32 16, %s21
          %577 = vsyncadd %s568, 0
          %s578 = sadd.s32 %s22, %s575
          %s579 = smul.addr %s578, 4
          %s580 = scalar_lea.hbm %s3, %s579
          %s581 = sshll.u32 %s571, 4
          %s582 = int_to_ptr.vmem [resolvable:$true] %s581
          %s583 = sshll.u32 %s580, 4
          %s584 = int_to_ptr.hbm [resolvable:$true] %s583
          %589 = dma.vmem_to_hbm [thread:$0]  %s582, 1024, %s584, %s568, 64, 64, 4
        $region36: #{conv2d.1} parent=31 // pred_fallthru
          _
      $region32: #{conv2d.1} parent=5 // pred_fallthru
        _
      %p590 = scmp.le.s32.totalorder 2, %s12
      // Predicated region
      $region37: #{conv2d.1} parent=5 // pred_check
        %p591 = pneg %p590
      $region38: #{conv2d.1} parent=5 // pred_check_branch
        %593 = sbr.rel (%p591) target = $region40
      $region39: #{conv2d.1} parent=5 // pred_region
        %s594 = ssub.s32 %s12, 2
        // Predicated region
        $region41: #{conv2d.1} parent=39 // pred_check
          %p595 = pneg %p133
        $region42: #{conv2d.1} parent=39 // pred_check_branch
          %597 = sbr.rel (%p595) target = $region44
        $region43: #{conv2d.1} parent=39 // pred_region
          %s598 = sand.u32 %s118, 1
          %s599 = scalar_lea.sflag [#allocation3], %s598
          %s600 = sand.u32 %s118, 1
          %s601 = smul.addr %s600, 64
          %s602 = scalar_lea.vmem [#allocation2], %s601
          %604 = dma.done %s599, 1024
        $region44: #{conv2d.1} parent=39 // pred_fallthru
          _
      $region40: #{conv2d.1} parent=5 // pred_fallthru
        _
    $region6: #{conv2d.1} parent=1 // loop_footer
      %s16 = sadd.s32 1, %s12
    $region7: #{conv2d.1} parent=1 // loop_footer_branch
      %11 = sbr.rel target = $region3
    $region8: #{conv2d.1} parent=1 // loop_exit
      _
    %605 = vsyncpa [#allocation3], 1
    %s606 = scalar_lea.sflag [#allocation3], 1
    %607 = vsyncpa %s606, 1

</llo_original>
